<compile_context>
chip_gen: v5e
topology: v5e:2x2
jax: 0.10.0
libtpu: 0.0.40
codegen_flags: <defaults>
</compile_context>

<pallas_src>
import math

import jax
import jax.numpy as jnp
from jax.experimental import pallas as pl
from jax.experimental.pallas import tpu as pltpu


_TARGET_BLOCK_BYTES = 4 * 1024 * 1024   # ~4 MiB per-stream block (counted at f32)
_VMEM_LIMIT_BYTES = 48 << 20            # safe on v7x (64 MiB phys), roomy on v5e/v6e


def _lcron_loss_kernel(coef_ref, pre_ref, rec_ref, joint_ref, out_ref):
    # coef_ref: SMEM (3,) f32 -> [0.5/w1^2, 0.5/w2^2, log(w1*w2)]
    coef_pre = coef_ref[0]
    coef_rec = coef_ref[1]
    log_reg = coef_ref[2]
    # In-kernel upcast: keeps HBM reads in the native (possibly bf16) dtype.
    pre = pre_ref[...].astype(jnp.float32)
    rec = rec_ref[...].astype(jnp.float32)
    joint = joint_ref[...].astype(jnp.float32)
    out_ref[...] = (coef_pre * pre + coef_rec * rec + joint + log_reg
                    ).astype(out_ref.dtype)


def _choose_tile_rows(rows, width):
    """Byte-budgeted row tile: ~4 MiB per stream, multiple of 8 sublanes,
    split into >=2 grid steps whenever rows allows (v7x megacore)."""
    tb = max(1, _TARGET_BLOCK_BYTES // (width * 4))
    if tb < rows:
        tb = max(8, (tb // 8) * 8)
    else:
        tb = rows                      # full extent is always a legal block
    if tb == rows and rows >= 16:      # force >=2 steps so both v7x TCs work
        tb = max(8, ((rows // 2) // 8) * 8)
    return tb


def lcron_loss(l_relax_prerank, l_relax_recall, l_joint,
               prerank_weight, recall_weight):
    """Pallas implementation of LcronLossModel.forward."""
    assert l_relax_prerank.shape == l_relax_recall.shape == l_joint.shape
    orig_shape = l_relax_prerank.shape
    n = math.prod(orig_shape) if orig_shape else 1

    # PyTorch promotion: f32 parameters * (b)f16/f32 losses -> f32 result.
    out_dtype = jnp.result_type(l_relax_prerank.dtype, l_relax_recall.dtype,
                                l_joint.dtype, jnp.float32)

    # Scalar prep: pure scalar math in the wrapper, prefetched into SMEM.
    w1 = prerank_weight.astype(jnp.float32).reshape(())
    w2 = recall_weight.astype(jnp.float32).reshape(())
    coefs = jnp.stack([0.5 / (w1 * w1), 0.5 / (w2 * w2), jnp.log(w1 * w2)])

    pre, rec, joint = l_relax_prerank, l_relax_recall, l_joint

    if len(orig_shape) == 2 and orig_shape[-1] > 0 and orig_shape[-1] % 128 == 0:
        # Native lane-dense 2-D input: use it as-is.
        rows, width = orig_shape
        flat = False
    else:
        # Flatten, pad to a multiple of 1024 (=> rows multiple of 8), and
        # reshape to a (rows, 128) slab; padded tail is sliced off afterwards.
        flat = True
        width = 128
        n_pad = ((n + 1023) // 1024) * 1024
        pad = n_pad - n
        rows = n_pad // width

        def _prep(x):
            x = x.reshape(-1)
            if pad:
                x = jnp.pad(x, (0, pad))
            return x.reshape(rows, width)

        pre, rec, joint = _prep(pre), _prep(rec), _prep(joint)

    tb = _choose_tile_rows(rows, width)
    grid = (pl.cdiv(rows, tb),)

    out = pl.pallas_call(
        _lcron_loss_kernel,
        out_shape=jax.ShapeDtypeStruct((rows, width), out_dtype),
        grid_spec=pltpu.PrefetchScalarGridSpec(
            num_scalar_prefetch=1,                       # coefs -> SMEM
            grid=grid,
            in_specs=[
                pl.BlockSpec((tb, width), lambda i, c: (i, 0)),   # prerank
                pl.BlockSpec((tb, width), lambda i, c: (i, 0)),   # recall
                pl.BlockSpec((tb, width), lambda i, c: (i, 0)),   # joint
            ],
            out_specs=pl.BlockSpec((tb, width), lambda i, c: (i, 0)),
        ),
        compiler_params=pltpu.CompilerParams(
            # Row tiles are independent (no accumulator): "parallel" lets v7x
            # shard tiles across its 2 TensorCores; neutral on v5e/v6e.
            dimension_semantics=("parallel",),
            vmem_limit_bytes=_VMEM_LIMIT_BYTES),
    )(coefs, pre, rec, joint)

    if flat:
        out = out.reshape(-1)[:n].reshape(orig_shape)
    return out


def _reference(pre, rec, joint, w1, w2):
    return (0.5 / jnp.square(w1) * pre
            + 0.5 / jnp.square(w2) * rec
            + joint
            + jnp.log(w1 * w2))


if __name__ == "__main__":
    key = jax.random.PRNGKey(0)
    k1, k2, k3, k4, k5, k6 = jax.random.split(key, 6)

    ok = True

    # Case 1: lane-dense 2-D f32 input (native path, multi-step grid),
    # default parameter init (ones) as in the PyTorch module.
    B, D = 256, 128
    p1 = jax.random.uniform(k1, (B, D), jnp.float32, 0.0, 2.0)
    r1 = jax.random.uniform(k2, (B, D), jnp.float32, 0.0, 2.0)
    j1 = jax.random.uniform(k3, (B, D), jnp.float32, 0.0, 2.0)
    w1 = jnp.ones((1,), jnp.float32)
    w2 = jnp.ones((1,), jnp.float32)
    out1 = jax.block_until_ready(lcron_loss(p1, r1, j1, w1, w2))
    ref1 = _reference(p1, r1, j1, w1, w2)
    ok &= bool(out1.shape == ref1.shape)
    ok &= bool(jnp.allclose(out1, ref1, atol=1e-6, rtol=1e-6))

    # Case 2: ragged bf16 input (pad + reshape path), non-trivial weights.
    p2 = jax.random.uniform(k4, (37, 19), jnp.float32, 0.0, 2.0).astype(jnp.bfloat16)
    r2 = jax.random.uniform(k5, (37, 19), jnp.float32, 0.0, 2.0).astype(jnp.bfloat16)
    j2 = jax.random.uniform(k6, (37, 19), jnp.float32, 0.0, 2.0).astype(jnp.bfloat16)
    w1b = jnp.full((1,), 1.5, jnp.float32)
    w2b = jnp.full((1,), 0.75, jnp.float32)
    out2 = jax.block_until_ready(lcron_loss(p2, r2, j2, w1b, w2b))
    ref2 = _reference(p2, r2, j2, w1b, w2b)
    ok &= bool(out2.shape == (37, 19))
    ok &= bool(out2.dtype == jnp.float32)   # matches torch promotion (f32 params)
    ok &= bool(jnp.allclose(out2, ref2, atol=1e-5, rtol=1e-5))

    if ok:
        print("KERNEL_OK")
</pallas_src>

<mosaic_0001>
module attributes {stable_mosaic.version = 11 : i64} {
  func.func @_lcron_loss_kernel(%arg0: i32, %arg1: memref<3xf32, #tpu.memory_space<smem>>, %arg2: memref<128x128xf32, #tpu.memory_space<vmem>>, %arg3: memref<128x128xf32, #tpu.memory_space<vmem>>, %arg4: memref<128x128xf32, #tpu.memory_space<vmem>>, %arg5: memref<128x128xf32, #tpu.memory_space<vmem>>) attributes {dimension_semantics = [#tpu.dimension_semantics<parallel>], iteration_bounds = array<i64: 2>, scalar_prefetch = 1 : i64, scratch_operands = 0 : i64, tpu.core_type = #tpu.core_type<tc>, window_params = [{transform_indices = @transform_0, window_bounds = array<i64: 128, 128>}, {transform_indices = @transform_1, window_bounds = array<i64: 128, 128>}, {transform_indices = @transform_2, window_bounds = array<i64: 128, 128>}, {transform_indices = @transform_3, window_bounds = array<i64: 128, 128>}]} {
    %c0 = arith.constant 0 : index
    %0 = memref.load %arg1[%c0] : memref<3xf32, #tpu.memory_space<smem>>
    %c1 = arith.constant 1 : index
    %1 = memref.load %arg1[%c1] : memref<3xf32, #tpu.memory_space<smem>>
    %c2 = arith.constant 2 : index
    %2 = memref.load %arg1[%c2] : memref<3xf32, #tpu.memory_space<smem>>
    %c0_0 = arith.constant 0 : index
    %c0_1 = arith.constant 0 : index
    %3 = vector.load %arg2[%c0_0, %c0_1] : memref<128x128xf32, #tpu.memory_space<vmem>>, vector<128x128xf32>
    %c0_2 = arith.constant 0 : index
    %c0_3 = arith.constant 0 : index
    %4 = vector.load %arg3[%c0_2, %c0_3] : memref<128x128xf32, #tpu.memory_space<vmem>>, vector<128x128xf32>
    %c0_4 = arith.constant 0 : index
    %c0_5 = arith.constant 0 : index
    %5 = vector.load %arg4[%c0_4, %c0_5] : memref<128x128xf32, #tpu.memory_space<vmem>>, vector<128x128xf32>
    %6 = vector.broadcast %0 : f32 to vector<128x128xf32>
    %7 = arith.mulf %6, %3 : vector<128x128xf32>
    %8 = vector.broadcast %1 : f32 to vector<128x128xf32>
    %9 = arith.mulf %8, %4 : vector<128x128xf32>
    %10 = arith.addf %7, %9 : vector<128x128xf32>
    %11 = arith.addf %10, %5 : vector<128x128xf32>
    %12 = vector.broadcast %2 : f32 to vector<128x128xf32>
    %13 = arith.addf %11, %12 : vector<128x128xf32>
    %c0_6 = arith.constant 0 : index
    %c0_7 = arith.constant 0 : index
    %14 = vector.load %arg5[%c0_6, %c0_7] : memref<128x128xf32, #tpu.memory_space<vmem>>, vector<128x128xf32>
    tpu.vector_store %arg5[%c0_6, %c0_7], %13 {strides = array<i32>} : memref<128x128xf32, #tpu.memory_space<vmem>>, vector<128x128xf32>,
    return
  }
  func.func @transform_0(%arg0: i32, %arg1: memref<3xf32, #tpu.memory_space<smem>>) -> (i32, i32) {
    %c0_i32 = arith.constant 0 : i32
    %c0_i32_0 = arith.constant 0 : i32
    return %arg0, %c0_i32 : i32, i32
  }
  func.func @transform_1(%arg0: i32, %arg1: memref<3xf32, #tpu.memory_space<smem>>) -> (i32, i32) {
    %c0_i32 = arith.constant 0 : i32
    %c0_i32_0 = arith.constant 0 : i32
    return %arg0, %c0_i32 : i32, i32
  }
  func.func @transform_2(%arg0: i32, %arg1: memref<3xf32, #tpu.memory_space<smem>>) -> (i32, i32) {
    %c0_i32 = arith.constant 0 : i32
    %c0_i32_0 = arith.constant 0 : i32
    return %arg0, %c0_i32 : i32, i32
  }
  func.func @transform_3(%arg0: i32, %arg1: memref<3xf32, #tpu.memory_space<smem>>) -> (i32, i32) {
    %c0_i32 = arith.constant 0 : i32
    %c0_i32_0 = arith.constant 0 : i32
    return %arg0, %c0_i32 : i32, i32
  }
}

</mosaic_0001>

<llo_original>
// kernel: tpu_custom_call.1
$region0: #{tpu_custom_call.1}
  #allocation0 [shape = 'u32[]', space=smem, size = 0x4, offset = 0x4, fixed_abs, tag = 'smem constant byte address 0x4 - core index']
  #allocation1 [shape = 'u32[72,128]{1,0:T(1,128)}', space=vmem, size = 0x9000, scoped, tag = 'internal scratch']
  #allocation2 [shape = 's32[1]{0}', space=sflag, size = 0x4, scoped, tag = 'scoped memory for tpu_custom_call.1']
  #allocation3 [shape = 'u8[512]{0}', space=smem, size = 0x200, scoped, tag = 'prefetched SMEM operand 0']
  %s0 = inlined_call_operand.hbm [shape: f32[3], index: 0, kind: input, shape index: {}]
  %s1 = inlined_call_operand.hbm [shape: f32[256,128], index: 1, kind: input, shape index: {}]
  %s2 = inlined_call_operand.hbm [shape: f32[256,128], index: 2, kind: input, shape index: {}]
  %s3 = inlined_call_operand.hbm [shape: f32[256,128], index: 3, kind: input, shape index: {}]
  %s4 = inlined_call_operand.hbm [shape: f32[256,128], index: 4, kind: output, shape index: {}]
  %s5 = sld [smem:[#allocation0]]
  $region57: #{tpu_custom_call.1} parent=0
    _
  %s7 = ssub.s32 1, %s5
  %s8 = scalar_select 0, %s7, %s5
  %s10 = sshll.u32 %s0, 4
  %s11 = int_to_ptr.hbm [resolvable:$true] %s10
  %13 = dma.hbm_to_smem %s11, 16, [#allocation3], [#allocation2]
  %15 = dma.done [#allocation2], 16
  %16 = sfence
  $region1: #{tpu_custom_call.1} parent=0
    #allocation4 [shape = 'u8[131072]{0}', space=vmem, size = 0x20000, scoped, tag = 'input window, operand 1']
    #allocation5 [shape = 's32[2]{0}', space=sflag, size = 0x8, scoped, tag = 'scoped memory for tpu_custom_call.1']
    #allocation6 [shape = 's32[2]{0}', space=sflag, size = 0x8, scoped, tag = 'scoped memory for tpu_custom_call.1']
    #allocation7 [shape = 'u8[131072]{0}', space=vmem, size = 0x20000, scoped, tag = 'input window, operand 2']
    #allocation8 [shape = 's32[2]{0}', space=sflag, size = 0x8, scoped, tag = 'scoped memory for tpu_custom_call.1']
    #allocation9 [shape = 'u8[131072]{0}', space=vmem, size = 0x20000, scoped, tag = 'input window, operand 3']
    #allocation10 [shape = 'u8[131072]{0}', space=vmem, size = 0x20000, scoped, tag = 'output window, operand 0']
    %17 = vsyncpa [#allocation5], 0
    %s18 = scalar_lea.sflag [#allocation5], 1
    %19 = vsyncpa %s18, 0
    %20 = vsyncpa [#allocation8], 0
    %s21 = scalar_lea.sflag [#allocation8], 1
    %22 = vsyncpa %s21, 0
    %23 = vsyncpa [#allocation6], 0
    %s24 = scalar_lea.sflag [#allocation6], 1
    %25 = vsyncpa %s24, 0
    loop: start=0, step=1, limit=4
    $region2: #{tpu_custom_call.1} parent=1 // loop_pre_header
      _
    $region3: #{tpu_custom_call.1} parent=1 // loop_header
      %s27 = sphi 0, %s31
      %p28 = scmp.ge.s32.totalorder %s27, 4
      %s37 = sphi 0, %s39
      %s40 = sphi 0, %s37
      %s41 = sphi 0, %s40
      %s57 = sphi 0, %s41
      %s63 = sphi 0, %s65
      %s66 = sphi 0, %s63
      %s67 = sphi 0, %s66
      %s83 = sphi 0, %s67
      %s89 = sphi 0, %s91
      %s92 = sphi 0, %s89
      %s93 = sphi 0, %s92
      %s109 = sphi 0, %s93
      %s115 = sphi 0, %s117
      %s118 = sphi 0, %s115
      %s119 = sphi 0, %s118
      %s135 = sphi 0, %s119
    $region4: #{tpu_custom_call.1} parent=1 // loop_header_branch
      %30 = sbr.rel (%p28) target = $region8
    $region5: #{tpu_custom_call.1} parent=1 // loop_body
      %s32 = ssub.s32 %s27, 1
      %s33 = ssub.s32 %s27, 2
      %s34 = sadd.s32 %s27, 1
      %s35 = ssub.s32 %s27, %s34
      %p36 = scmp.eq.s32.totalorder %s35, 0
      %s38 = sadd.s32 %s37, 1
      %s39 = scalar_select %p36, %s37, %s38
      %p42 = pneg %p36
      %p43 = scmp.eq.s32.totalorder %s27, 1
      %p44 = por %p42, %p43
      %p45 = scmp.ne.s32.totalorder %s37, %s40
      %p46 = scmp.eq.s32.totalorder %s27, 0
      %p47 = por %p45, %p46
      %p48 = scmp.ne.s32.totalorder %s37, %s40
      %p49 = scmp.eq.s32.totalorder %s32, 1
      %p50 = por %p48, %p49
      %p51 = scmp.ne.s32.totalorder %s40, %s41
      %p52 = scmp.eq.s32.totalorder %s32, 0
      %p53 = por %p51, %p52
      %p54 = scmp.ne.s32.totalorder %s40, %s41
      %p55 = scmp.eq.s32.totalorder %s33, 1
      %p56 = por %p54, %p55
      %p58 = scmp.ne.s32.totalorder %s41, %s57
      %p59 = scmp.eq.s32.totalorder %s33, 0
      %p60 = por %p58, %p59
      %s61 = ssub.s32 %s27, %s34
      %p62 = scmp.eq.s32.totalorder %s61, 0
      %s64 = sadd.s32 %s63, 1
      %s65 = scalar_select %p62, %s63, %s64
      %p68 = pneg %p62
      %p69 = scmp.eq.s32.totalorder %s27, 1
      %p70 = por %p68, %p69
      %p71 = scmp.ne.s32.totalorder %s63, %s66
      %p72 = scmp.eq.s32.totalorder %s27, 0
      %p73 = por %p71, %p72
      %p74 = scmp.ne.s32.totalorder %s63, %s66
      %p75 = scmp.eq.s32.totalorder %s32, 1
      %p76 = por %p74, %p75
      %p77 = scmp.ne.s32.totalorder %s66, %s67
      %p78 = scmp.eq.s32.totalorder %s32, 0
      %p79 = por %p77, %p78
      %p80 = scmp.ne.s32.totalorder %s66, %s67
      %p81 = scmp.eq.s32.totalorder %s33, 1
      %p82 = por %p80, %p81
      %p84 = scmp.ne.s32.totalorder %s67, %s83
      %p85 = scmp.eq.s32.totalorder %s33, 0
      %p86 = por %p84, %p85
      %s87 = ssub.s32 %s27, %s34
      %p88 = scmp.eq.s32.totalorder %s87, 0
      %s90 = sadd.s32 %s89, 1
      %s91 = scalar_select %p88, %s89, %s90
      %p94 = pneg %p88
      %p95 = scmp.eq.s32.totalorder %s27, 1
      %p96 = por %p94, %p95
      %p97 = scmp.ne.s32.totalorder %s89, %s92
      %p98 = scmp.eq.s32.totalorder %s27, 0
      %p99 = por %p97, %p98
      %p100 = scmp.ne.s32.totalorder %s89, %s92
      %p101 = scmp.eq.s32.totalorder %s32, 1
      %p102 = por %p100, %p101
      %p103 = scmp.ne.s32.totalorder %s92, %s93
      %p104 = scmp.eq.s32.totalorder %s32, 0
      %p105 = por %p103, %p104
      %p106 = scmp.ne.s32.totalorder %s92, %s93
      %p107 = scmp.eq.s32.totalorder %s33, 1
      %p108 = por %p106, %p107
      %p110 = scmp.ne.s32.totalorder %s93, %s109
      %p111 = scmp.eq.s32.totalorder %s33, 0
      %p112 = por %p110, %p111
      %s113 = ssub.s32 %s27, %s34
      %p114 = scmp.eq.s32.totalorder %s113, 0
      %s116 = sadd.s32 %s115, 1
      %s117 = scalar_select %p114, %s115, %s116
      %p120 = pneg %p114
      %p121 = scmp.eq.s32.totalorder %s27, 1
      %p122 = por %p120, %p121
      %p123 = scmp.ne.s32.totalorder %s115, %s118
      %p124 = scmp.eq.s32.totalorder %s27, 0
      %p125 = por %p123, %p124
      %p126 = scmp.ne.s32.totalorder %s115, %s118
      %p127 = scmp.eq.s32.totalorder %s32, 1
      %p128 = por %p126, %p127
      %p129 = scmp.ne.s32.totalorder %s118, %s119
      %p130 = scmp.eq.s32.totalorder %s32, 0
      %p131 = por %p129, %p130
      %p132 = scmp.ne.s32.totalorder %s118, %s119
      %p133 = scmp.eq.s32.totalorder %s33, 1
      %p134 = por %p132, %p133
      %p136 = scmp.ne.s32.totalorder %s119, %s135
      %p137 = scmp.eq.s32.totalorder %s33, 0
      %p138 = por %p136, %p137
      %p139 = scmp.le.s32.totalorder 1, %s27
      %p140 = scmp.lt.s32.totalorder %s27, 3
      %p141 = pnand %p139, %p140
      %p142 = pneg %p141
      // Predicated region
      $region9: #{tpu_custom_call.1} parent=5 // pred_check
        _
      $region10: #{tpu_custom_call.1} parent=5 // pred_check_branch
        %144 = sbr.rel (%p141) target = $region12
      $region11: #{tpu_custom_call.1} parent=5 // pred_region
        %s145 = ssub.s32 %s27, 1
      $region12: #{tpu_custom_call.1} parent=5 // pred_fallthru
        _
      %p146 = scmp.lt.s32.totalorder %s27, 2
      // Predicated region
      $region13: #{tpu_custom_call.1} parent=5 // pred_check
        %p147 = pneg %p146
      $region14: #{tpu_custom_call.1} parent=5 // pred_check_branch
        %149 = sbr.rel (%p147) target = $region16
      $region15: #{tpu_custom_call.1} parent=5 // pred_region
        // Predicated region
        $region17: #{tpu_custom_call.1} parent=15 // pred_check
          %p150 = pneg %p47
        $region18: #{tpu_custom_call.1} parent=15 // pred_check_branch
          %152 = sbr.rel (%p150) target = $region20
        $region19: #{tpu_custom_call.1} parent=15 // pred_region
          %s153 = sand.u32 %s37, 1
          %s154 = scalar_lea.sflag [#allocation5], %s153
          %s155 = sand.u32 %s37, 1
          %s156 = smul.addr %s155, 128
          %s157 = scalar_lea.vmem [#allocation4], %s156
          %s158 = smul.u32 16, %s27
          %160 = vsyncadd %s154, 0
          %s161 = smul.addr %s158, 8
          %s162 = scalar_lea.hbm %s1, %s161
          %s163 = sshll.u32 %s162, 4
          %s164 = int_to_ptr.hbm [resolvable:$true] %s163
          %s165 = sshll.u32 %s157, 4
          %s166 = int_to_ptr.vmem [resolvable:$true] %s165
          %171 = dma.hbm_to_vmem [thread:$0]  %s164, 2048, %s166, %s154, 128, 128, 8
        $region20: #{tpu_custom_call.1} parent=15 // pred_fallthru
          _
        // Predicated region
        $region21: #{tpu_custom_call.1} parent=15 // pred_check
          %p172 = pneg %p73
        $region22: #{tpu_custom_call.1} parent=15 // pred_check_branch
          %174 = sbr.rel (%p172) target = $region24
        $region23: #{tpu_custom_call.1} parent=15 // pred_region
          %s175 = sand.u32 %s27, 1
          %s176 = scalar_lea.sflag [#allocation8], %s175
          %s177 = sand.u32 %s63, 1
          %s178 = smul.addr %s177, 128
          %s179 = scalar_lea.vmem [#allocation7], %s178
          %s180 = smul.u32 16, %s27
          %182 = vsyncadd %s176, 0
          %s183 = smul.addr %s180, 8
          %s184 = scalar_lea.hbm %s2, %s183
          %s185 = sshll.u32 %s184, 4
          %s186 = int_to_ptr.hbm [resolvable:$true] %s185
          %s187 = sshll.u32 %s179, 4
          %s188 = int_to_ptr.vmem [resolvable:$true] %s187
          %193 = dma.hbm_to_vmem [thread:$0]  %s186, 2048, %s188, %s176, 128, 128, 8
        $region24: #{tpu_custom_call.1} parent=15 // pred_fallthru
          _
        // Predicated region
        $region25: #{tpu_custom_call.1} parent=15 // pred_check
          %p194 = pneg %p99
        $region26: #{tpu_custom_call.1} parent=15 // pred_check_branch
          %196 = sbr.rel (%p194) target = $region28
        $region27: #{tpu_custom_call.1} parent=15 // pred_region
          %s197 = sand.u32 %s27, 1
          %s198 = scalar_lea.sflag [#allocation8], %s197
          %s199 = sand.u32 %s89, 1
          %s200 = smul.addr %s199, 128
          %s201 = scalar_lea.vmem [#allocation9], %s200
          %s202 = smul.u32 16, %s27
          %204 = vsyncadd %s198, 0
          %s205 = smul.addr %s202, 8
          %s206 = scalar_lea.hbm %s3, %s205
          %s207 = sshll.u32 %s206, 4
          %s208 = int_to_ptr.hbm [resolvable:$true] %s207
          %s209 = sshll.u32 %s201, 4
          %s210 = int_to_ptr.vmem [resolvable:$true] %s209
          %215 = dma.hbm_to_vmem [thread:$0]  %s208, 2048, %s210, %s198, 128, 128, 8
        $region28: #{tpu_custom_call.1} parent=15 // pred_fallthru
          _
      $region16: #{tpu_custom_call.1} parent=5 // pred_fallthru
        _
      %p216 = scmp.le.s32.totalorder 1, %s27
      %p217 = scmp.lt.s32.totalorder %s27, 3
      %p218 = pnand %p216, %p217
      %p219 = pneg %p218
      // Predicated region
      $region29: #{tpu_custom_call.1} parent=5 // pred_check
        _
      $region30: #{tpu_custom_call.1} parent=5 // pred_check_branch
        %221 = sbr.rel (%p218) target = $region32
      $region31: #{tpu_custom_call.1} parent=5 // pred_region
        %s222 = ssub.s32 %s27, 1
        %s223 = sand.u32 %s40, 1
        %s224 = scalar_lea.sflag [#allocation5], %s223
        %s225 = sand.u32 %s40, 1
        %s226 = smul.addr %s225, 128
        %s227 = scalar_lea.vmem [#allocation4], %s226
        // Predicated region
        $region33: #{tpu_custom_call.1} parent=31 // pred_check
          %p228 = pneg %p53
        $region34: #{tpu_custom_call.1} parent=31 // pred_check_branch
          %230 = sbr.rel (%p228) target = $region36
        $region35: #{tpu_custom_call.1} parent=31 // pred_region
          %232 = dma.done %s224, 2048
        $region36: #{tpu_custom_call.1} parent=31 // pred_fallthru
          _
        %s233 = sand.u32 %s32, 1
        %s234 = scalar_lea.sflag [#allocation8], %s233
        %s235 = sand.u32 %s66, 1
        %s236 = smul.addr %s235, 128
        %s237 = scalar_lea.vmem [#allocation7], %s236
        // Predicated region
        $region37: #{tpu_custom_call.1} parent=31 // pred_check
          %p238 = pneg %p79
        $region38: #{tpu_custom_call.1} parent=31 // pred_check_branch
          %240 = sbr.rel (%p238) target = $region40
        $region39: #{tpu_custom_call.1} parent=31 // pred_region
          %242 = dma.done %s234, 2048
        $region40: #{tpu_custom_call.1} parent=31 // pred_fallthru
          _
        %s243 = sand.u32 %s32, 1
        %s244 = scalar_lea.sflag [#allocation8], %s243
        %s245 = sand.u32 %s92, 1
        %s246 = smul.addr %s245, 128
        %s247 = scalar_lea.vmem [#allocation9], %s246
        // Predicated region
        $region41: #{tpu_custom_call.1} parent=31 // pred_check
          %p248 = pneg %p105
        $region42: #{tpu_custom_call.1} parent=31 // pred_check_branch
          %250 = sbr.rel (%p248) target = $region44
        $region43: #{tpu_custom_call.1} parent=31 // pred_region
          %252 = dma.done %s244, 2048
        $region44: #{tpu_custom_call.1} parent=31 // pred_fallthru
          _
        %s253 = sand.u32 %s40, 1
        %s254 = scalar_lea.sflag [#allocation5], %s253
        %s255 = sand.u32 %s40, 1
        %s256 = smul.addr %s255, 128
        %s257 = scalar_lea.vmem [#allocation4], %s256
        %p258 = pneg %p53
        %p259 = pneg %p50
        %s260 = sand.u32 %s32, 1
        %s261 = scalar_lea.sflag [#allocation8], %s260
        %s262 = sand.u32 %s66, 1
        %s263 = smul.addr %s262, 128
        %s264 = scalar_lea.vmem [#allocation7], %s263
        %p265 = pneg %p79
        %p266 = pneg %p76
        %s267 = sand.u32 %s32, 1
        %s268 = scalar_lea.sflag [#allocation8], %s267
        %s269 = sand.u32 %s92, 1
        %s270 = smul.addr %s269, 128
        %s271 = scalar_lea.vmem [#allocation9], %s270
        %p272 = pneg %p105
        %p273 = pneg %p102
        %p274 = pneg %p131
        %p275 = pneg %p128
        %s276 = sand.u32 %s118, 1
        %s277 = scalar_lea.sflag [#allocation6], %s276
        %s278 = sand.u32 %s118, 1
        %s279 = smul.addr %s278, 128
        %s280 = scalar_lea.vmem [#allocation10], %s279
        %s281 = smul.u32 16, %s32
        %s282 = smul.u32 16, %s32
        %s283 = smul.u32 16, %s32
        %s284 = smul.u32 16, %s32
        %s285 = sld [smem:[#allocation3]]
        %s286 = sld [smem:[#allocation3 + $0x1]]
        %s287 = sld [smem:[#allocation3 + $0x2]]
        %v288 = vld [vmem:[%s227] sm:$0xff]
        %v289 = vld [vmem:[%s227 + $0x8] sm:$0xff]
        %v290 = vld [vmem:[%s227 + $0x10] sm:$0xff]
        %v291 = vld [vmem:[%s227 + $0x18] sm:$0xff]
        %v292 = vld [vmem:[%s227 + $0x20] sm:$0xff]
        %v293 = vld [vmem:[%s227 + $0x28] sm:$0xff]
        %v294 = vld [vmem:[%s227 + $0x30] sm:$0xff]
        %v295 = vld [vmem:[%s227 + $0x38] sm:$0xff]
        %v296 = vld [vmem:[%s227 + $0x40] sm:$0xff]
        %v297 = vld [vmem:[%s227 + $0x48] sm:$0xff]
        %v298 = vld [vmem:[%s227 + $0x50] sm:$0xff]
        %v299 = vld [vmem:[%s227 + $0x58] sm:$0xff]
        %v300 = vld [vmem:[%s227 + $0x60] sm:$0xff]
        %v301 = vld [vmem:[%s227 + $0x68] sm:$0xff]
        %v302 = vld [vmem:[%s227 + $0x70] sm:$0xff]
        %v303 = vld [vmem:[%s227 + $0x78] sm:$0xff]
        %v304 = vld [vmem:[%s237] sm:$0xff]
        %v305 = vld [vmem:[%s237 + $0x8] sm:$0xff]
        %v306 = vld [vmem:[%s237 + $0x10] sm:$0xff]
        %v307 = vld [vmem:[%s237 + $0x18] sm:$0xff]
        %v308 = vld [vmem:[%s237 + $0x20] sm:$0xff]
        %v309 = vld [vmem:[%s237 + $0x28] sm:$0xff]
        %v310 = vld [vmem:[%s237 + $0x30] sm:$0xff]
        %v311 = vld [vmem:[%s237 + $0x38] sm:$0xff]
        %v312 = vld [vmem:[%s237 + $0x40] sm:$0xff]
        %v313 = vld [vmem:[%s237 + $0x48] sm:$0xff]
        %v314 = vld [vmem:[%s237 + $0x50] sm:$0xff]
        %v315 = vld [vmem:[%s237 + $0x58] sm:$0xff]
        %v316 = vld [vmem:[%s237 + $0x60] sm:$0xff]
        %v317 = vld [vmem:[%s237 + $0x68] sm:$0xff]
        %v318 = vld [vmem:[%s237 + $0x70] sm:$0xff]
        %v319 = vld [vmem:[%s237 + $0x78] sm:$0xff]
        %v320 = vld [vmem:[%s247] sm:$0xff]
        %v321 = vld [vmem:[%s247 + $0x8] sm:$0xff]
        %v322 = vld [vmem:[%s247 + $0x10] sm:$0xff]
        %v323 = vld [vmem:[%s247 + $0x18] sm:$0xff]
        %v324 = vld [vmem:[%s247 + $0x20] sm:$0xff]
        %v325 = vld [vmem:[%s247 + $0x28] sm:$0xff]
        %v326 = vld [vmem:[%s247 + $0x30] sm:$0xff]
        %v327 = vld [vmem:[%s247 + $0x38] sm:$0xff]
        %v328 = vld [vmem:[%s247 + $0x40] sm:$0xff]
        %v329 = vld [vmem:[%s247 + $0x48] sm:$0xff]
        %v330 = vld [vmem:[%s247 + $0x50] sm:$0xff]
        %v331 = vld [vmem:[%s247 + $0x58] sm:$0xff]
        %v332 = vld [vmem:[%s247 + $0x60] sm:$0xff]
        %v333 = vld [vmem:[%s247 + $0x68] sm:$0xff]
        %v334 = vld [vmem:[%s247 + $0x70] sm:$0xff]
        %v335 = vld [vmem:[%s247 + $0x78] sm:$0xff]
        %v336 = vstv %s285
        %v337 = vmul.f32 %v336, %v288
        %v338 = vmul.f32 %v336, %v289
        %v339 = vmul.f32 %v336, %v290
        %v340 = vmul.f32 %v336, %v291
        %v341 = vmul.f32 %v336, %v292
        %v342 = vmul.f32 %v336, %v293
        %v343 = vmul.f32 %v336, %v294
        %v344 = vmul.f32 %v336, %v295
        %v345 = vmul.f32 %v336, %v296
        %v346 = vmul.f32 %v336, %v297
        %v347 = vmul.f32 %v336, %v298
        %v348 = vmul.f32 %v336, %v299
        %v349 = vmul.f32 %v336, %v300
        %v350 = vmul.f32 %v336, %v301
        %v351 = vmul.f32 %v336, %v302
        %v352 = vmul.f32 %v336, %v303
        %v353 = vstv %s286
        %v354 = vmul.f32 %v353, %v304
        %v355 = vmul.f32 %v353, %v305
        %v356 = vmul.f32 %v353, %v306
        %v357 = vmul.f32 %v353, %v307
        %v358 = vmul.f32 %v353, %v308
        %v359 = vmul.f32 %v353, %v309
        %v360 = vmul.f32 %v353, %v310
        %v361 = vmul.f32 %v353, %v311
        %v362 = vmul.f32 %v353, %v312
        %v363 = vmul.f32 %v353, %v313
        %v364 = vmul.f32 %v353, %v314
        %v365 = vmul.f32 %v353, %v315
        %v366 = vmul.f32 %v353, %v316
        %v367 = vmul.f32 %v353, %v317
        %v368 = vmul.f32 %v353, %v318
        %v369 = vmul.f32 %v353, %v319
        %v370 = vadd.f32 %v337, %v354
        %v371 = vadd.f32 %v338, %v355
        %v372 = vadd.f32 %v339, %v356
        %v373 = vadd.f32 %v340, %v357
        %v374 = vadd.f32 %v341, %v358
        %v375 = vadd.f32 %v342, %v359
        %v376 = vadd.f32 %v343, %v360
        %v377 = vadd.f32 %v344, %v361
        %v378 = vadd.f32 %v345, %v362
        %v379 = vadd.f32 %v346, %v363
        %v380 = vadd.f32 %v347, %v364
        %v381 = vadd.f32 %v348, %v365
        %v382 = vadd.f32 %v349, %v366
        %v383 = vadd.f32 %v350, %v367
        %v384 = vadd.f32 %v351, %v368
        %v385 = vadd.f32 %v352, %v369
        %v386 = vadd.f32 %v370, %v320
        %v387 = vadd.f32 %v371, %v321
        %v388 = vadd.f32 %v372, %v322
        %v389 = vadd.f32 %v373, %v323
        %v390 = vadd.f32 %v374, %v324
        %v391 = vadd.f32 %v375, %v325
        %v392 = vadd.f32 %v376, %v326
        %v393 = vadd.f32 %v377, %v327
        %v394 = vadd.f32 %v378, %v328
        %v395 = vadd.f32 %v379, %v329
        %v396 = vadd.f32 %v380, %v330
        %v397 = vadd.f32 %v381, %v331
        %v398 = vadd.f32 %v382, %v332
        %v399 = vadd.f32 %v383, %v333
        %v400 = vadd.f32 %v384, %v334
        %v401 = vadd.f32 %v385, %v335
        %v402 = vstv %s287
        %v403 = vadd.f32 %v386, %v402
        %v404 = vadd.f32 %v387, %v402
        %v405 = vadd.f32 %v388, %v402
        %v406 = vadd.f32 %v389, %v402
        %v407 = vadd.f32 %v390, %v402
        %v408 = vadd.f32 %v391, %v402
        %v409 = vadd.f32 %v392, %v402
        %v410 = vadd.f32 %v393, %v402
        %v411 = vadd.f32 %v394, %v402
        %v412 = vadd.f32 %v395, %v402
        %v413 = vadd.f32 %v396, %v402
        %v414 = vadd.f32 %v397, %v402
        %v415 = vadd.f32 %v398, %v402
        %v416 = vadd.f32 %v399, %v402
        %v417 = vadd.f32 %v400, %v402
        %v418 = vadd.f32 %v401, %v402
        %419 = vst [vmem:[%s280] sm:$0xff] %v403
        %420 = vst [vmem:[%s280 + $0x8] sm:$0xff] %v404
        %421 = vst [vmem:[%s280 + $0x10] sm:$0xff] %v405
        %422 = vst [vmem:[%s280 + $0x18] sm:$0xff] %v406
        %423 = vst [vmem:[%s280 + $0x20] sm:$0xff] %v407
        %424 = vst [vmem:[%s280 + $0x28] sm:$0xff] %v408
        %425 = vst [vmem:[%s280 + $0x30] sm:$0xff] %v409
        %426 = vst [vmem:[%s280 + $0x38] sm:$0xff] %v410
        %427 = vst [vmem:[%s280 + $0x40] sm:$0xff] %v411
        %428 = vst [vmem:[%s280 + $0x48] sm:$0xff] %v412
        %429 = vst [vmem:[%s280 + $0x50] sm:$0xff] %v413
        %430 = vst [vmem:[%s280 + $0x58] sm:$0xff] %v414
        %431 = vst [vmem:[%s280 + $0x60] sm:$0xff] %v415
        %432 = vst [vmem:[%s280 + $0x68] sm:$0xff] %v416
        %433 = vst [vmem:[%s280 + $0x70] sm:$0xff] %v417
        %434 = vst [vmem:[%s280 + $0x78] sm:$0xff] %v418
        %s435 = sand.u32 %s118, 1
        %s436 = scalar_lea.sflag [#allocation6], %s435
        %s437 = sand.u32 %s118, 1
        %s438 = smul.addr %s437, 128
        %s439 = scalar_lea.vmem [#allocation10], %s438
        // Predicated region
        $region45: #{tpu_custom_call.1} parent=31 // pred_check
          %p440 = pneg %p128
        $region46: #{tpu_custom_call.1} parent=31 // pred_check_branch
          %442 = sbr.rel (%p440) target = $region48
        $region47: #{tpu_custom_call.1} parent=31 // pred_region
          %s443 = smul.u32 16, %s32
          %445 = vsyncadd %s436, 0
          %s446 = smul.addr %s443, 8
          %s447 = scalar_lea.hbm %s4, %s446
          %s448 = sshll.u32 %s439, 4
          %s449 = int_to_ptr.vmem [resolvable:$true] %s448
          %s450 = sshll.u32 %s447, 4
          %s451 = int_to_ptr.hbm [resolvable:$true] %s450
          %456 = dma.vmem_to_hbm [thread:$0]  %s449, 2048, %s451, %s436, 128, 128, 8
        $region48: #{tpu_custom_call.1} parent=31 // pred_fallthru
          _
      $region32: #{tpu_custom_call.1} parent=5 // pred_fallthru
        _
      %p457 = scmp.le.s32.totalorder 2, %s27
      // Predicated region
      $region49: #{tpu_custom_call.1} parent=5 // pred_check
        %p458 = pneg %p457
      $region50: #{tpu_custom_call.1} parent=5 // pred_check_branch
        %460 = sbr.rel (%p458) target = $region52
      $region51: #{tpu_custom_call.1} parent=5 // pred_region
        %s461 = ssub.s32 %s27, 2
        // Predicated region
        $region53: #{tpu_custom_call.1} parent=51 // pred_check
          %p462 = pneg %p134
        $region54: #{tpu_custom_call.1} parent=51 // pred_check_branch
          %464 = sbr.rel (%p462) target = $region56
        $region55: #{tpu_custom_call.1} parent=51 // pred_region
          %s465 = sand.u32 %s119, 1
          %s466 = scalar_lea.sflag [#allocation6], %s465
          %s467 = sand.u32 %s119, 1
          %s468 = smul.addr %s467, 128
          %s469 = scalar_lea.vmem [#allocation10], %s468
          %471 = dma.done %s466, 2048
        $region56: #{tpu_custom_call.1} parent=51 // pred_fallthru
          _
      $region52: #{tpu_custom_call.1} parent=5 // pred_fallthru
        _
    $region6: #{tpu_custom_call.1} parent=1 // loop_footer
      %s31 = sadd.s32 1, %s27
    $region7: #{tpu_custom_call.1} parent=1 // loop_footer_branch
      %26 = sbr.rel target = $region3
    $region8: #{tpu_custom_call.1} parent=1 // loop_exit
      _
    %472 = vsyncpa [#allocation5], 1
    %s473 = scalar_lea.sflag [#allocation5], 1
    %474 = vsyncpa %s473, 1
    %475 = vsyncpa [#allocation8], 1
    %s476 = scalar_lea.sflag [#allocation8], 1
    %477 = vsyncpa %s476, 1
    %478 = vsyncpa [#allocation6], 1
    %s479 = scalar_lea.sflag [#allocation6], 1
    %480 = vsyncpa %s479, 1

</llo_original>
